<compile_context>
chip_gen: v5e
topology: v5e:2x2
jax: 0.10.0
libtpu: 0.0.40
codegen_flags: <defaults>
</compile_context>

<pallas_src>
import jax
import jax.numpy as jnp
from jax.experimental import pallas as pl
from jax.experimental.pallas import tpu as pltpu

WIDTH = 1024            # lane-dense last dim (multiple of 128) -> unmasked vst
SUBLANES = 8            # f32 sublane tile
MAX_TILE_ROWS = 1024    # (1024, 1024) f32 tile = 4 MiB per buffer
TARGET_STEPS = 4        # aim for >=4 grid steps (pipelining + 2-TC split on v7x)
SMALL_N = 64 * 1024     # below this many elements, plain XLA is strictly faster


def net_kernel(params_ref, x_ref, o_ref):
    # params_ref: (4,) f32 in SMEM = [w1, b1, w2, b2]
    # x_ref / o_ref: (tile_rows, WIDTH) f32 tiles in VMEM.
    w1 = params_ref[0]
    b1 = params_ref[1]
    w2 = params_ref[2]
    b2 = params_ref[3]
    x = x_ref[...]
    h = jnp.maximum(x * w1 + b1, 0.0)   # fc1 (1x1) + ReLU, pure VPU
    o_ref[...] = h * w2 + b2            # fc2 (1x1)


def _fast_forward(x, w1, b1, w2, b2):
    # Fused XLA elementwise path (small N or non-f32 dtypes).
    h = jnp.maximum(x * w1[0, 0] + b1[0], 0.0)
    return h * w2[0, 0] + b2[0]


def net_forward(x, w1, b1, w2, b2, *, force_pallas=False):
    # x: (N, 1), same (N, in_features) convention as torch.nn.Linear.
    n = x.shape[0]

    # Small-N / non-f32 fast path: kernel launch + pad/reshape overhead dwarfs
    # the actual work; the Pallas tiling below also assumes f32 (8-row tiles).
    if not force_pallas and (x.size < SMALL_N or x.dtype != jnp.float32):
        return _fast_forward(x, w1, b1, w2, b2)

    # Pack the four scalars into one SMEM operand.
    params = jnp.concatenate(
        [w1.reshape(-1), b1.reshape(-1), w2.reshape(-1), b2.reshape(-1)]
    ).astype(jnp.float32)

    flat = x.reshape(-1).astype(jnp.float32)

    # Pad only up to a whole number of lane-wide rows (min 8 sublane rows),
    # NOT to a tile multiple -- the last grid block may be partial.
    rows = max(pl.cdiv(n, WIDTH), SUBLANES)
    padded_len = rows * WIDTH
    if padded_len != n:
        flat = jnp.pad(flat, (0, padded_len - n))
    x2d = flat.reshape(rows, WIDTH)

    # Tile policy: >= TARGET_STEPS grid steps, <= 4 MiB per tile, power-of-two
    # bucketing of tile_rows to limit the number of distinct compilations.
    tile_rows = min(
        MAX_TILE_ROWS,
        max(SUBLANES, pl.next_power_of_2(pl.cdiv(rows, TARGET_STEPS))),
    )
    grid = (pl.cdiv(rows, tile_rows),)

    smem_spec = pl.BlockSpec(memory_space=pltpu.MemorySpace.SMEM)

    out2d = pl.pallas_call(
        net_kernel,
        out_shape=jax.ShapeDtypeStruct((rows, WIDTH), jnp.float32),
        grid=grid,
        in_specs=[
            smem_spec,                                           # packed params (4,)
            pl.BlockSpec((tile_rows, WIDTH), lambda i: (i, 0)),  # x tile (VMEM)
        ],
        out_specs=pl.BlockSpec((tile_rows, WIDTH), lambda i: (i, 0)),
        compiler_params=pltpu.CompilerParams(
            # Row-tile axis is embarrassingly parallel -> megacore split on v7x.
            dimension_semantics=("parallel",),
            # 4 MiB tiles, double-buffered in+out = 16 MiB: fits v7x's 32 MiB
            # scoped ceiling and is plenty for v5e/v6e.
            vmem_limit_bytes=32 * 1024 * 1024,
            # Let XLA fuse the pad/reshape producer into the kernel's input DMA
            # (avoids an extra full HBM pass for the padded slab).
            allow_input_fusion=[False, True],
        ),
    )(params, x2d)

    # Restore the (N, 1) contract (slice off padding only if any was added).
    out = out2d.reshape(-1)
    if padded_len != n:
        out = out[:n]
    return out.reshape(n, 1).astype(x.dtype)


def _reference(x, w1, b1, w2, b2):
    return jnp.maximum(x @ w1.T + b1, 0.0) @ w2.T + b2


if __name__ == "__main__":
    key = jax.random.PRNGKey(0)
    kx, k1, k2, k3, k4, kx2, kx3 = jax.random.split(key, 7)

    # Deterministic parameter init (PyTorch Linear(1,1) default is U(-1, 1)).
    w1 = jax.random.uniform(k1, (1, 1), jnp.float32, -1.0, 1.0)
    b1 = jax.random.uniform(k2, (1,), jnp.float32, -1.0, 1.0)
    w2 = jax.random.uniform(k3, (1, 1), jnp.float32, -1.0, 1.0)
    b2 = jax.random.uniform(k4, (1,), jnp.float32, -1.0, 1.0)

    # Small batch (8, 1), as the module's Linear(1, 1) implies.  Force the
    # Pallas path so the kernel itself is exercised even at tiny N.
    x = jax.random.normal(kx, (8, 1), jnp.float32)
    out = jax.block_until_ready(net_forward(x, w1, b1, w2, b2, force_pallas=True))
    ref = _reference(x, w1, b1, w2, b2)
    assert out.shape == (8, 1)
    assert jnp.allclose(out, ref, atol=1e-6), "mismatch vs reference (N=8, pallas)"

    # Same inputs through the small-N fast path (auto-selected).
    out_fast = jax.block_until_ready(net_forward(x, w1, b1, w2, b2))
    assert jnp.allclose(out_fast, ref, atol=1e-6), "mismatch vs reference (N=8, fast)"

    # Non-multiple-of-width batch to exercise padding.
    x_med = jax.random.normal(kx2, (2500, 1), jnp.float32)
    out_med = jax.block_until_ready(net_forward(x_med, w1, b1, w2, b2, force_pallas=True))
    ref_med = _reference(x_med, w1, b1, w2, b2)
    assert out_med.shape == (2500, 1)
    assert jnp.allclose(out_med, ref_med, atol=1e-6), "mismatch vs reference (N=2500)"

    # Awkward size that exercises a multi-step grid with a partial last block.
    x_big = jax.random.normal(kx3, (70001, 1), jnp.float32)
    out_big = jax.block_until_ready(net_forward(x_big, w1, b1, w2, b2, force_pallas=True))
    ref_big = _reference(x_big, w1, b1, w2, b2)
    assert out_big.shape == (70001, 1)
    assert jnp.allclose(out_big, ref_big, atol=1e-6), "mismatch vs reference (N=70001)"

    print("KERNEL_OK")
</pallas_src>

<mosaic_0001>
module attributes {stable_mosaic.version = 11 : i64} {
  func.func @net_kernel(%arg0: i32, %arg1: memref<4xf32, #tpu.memory_space<smem>>, %arg2: memref<8x1024xf32, #tpu.memory_space<vmem>>, %arg3: memref<8x1024xf32, #tpu.memory_space<vmem>>) attributes {dimension_semantics = [#tpu.dimension_semantics<parallel>], iteration_bounds = array<i64: 1>, scalar_prefetch = 0 : i64, scratch_operands = 0 : i64, tpu.core_type = #tpu.core_type<tc>, window_params = [{transform_indices = @transform_0, window_bounds = array<i64: 4>}, {transform_indices = @transform_1, window_bounds = array<i64: 8, 1024>}, {transform_indices = @transform_2, window_bounds = array<i64: 8, 1024>}]} {
    %c0 = arith.constant 0 : index
    %0 = memref.load %arg1[%c0] : memref<4xf32, #tpu.memory_space<smem>>
    %c1 = arith.constant 1 : index
    %1 = memref.load %arg1[%c1] : memref<4xf32, #tpu.memory_space<smem>>
    %c2 = arith.constant 2 : index
    %2 = memref.load %arg1[%c2] : memref<4xf32, #tpu.memory_space<smem>>
    %c3 = arith.constant 3 : index
    %3 = memref.load %arg1[%c3] : memref<4xf32, #tpu.memory_space<smem>>
    %c0_0 = arith.constant 0 : index
    %c0_1 = arith.constant 0 : index
    %4 = vector.load %arg2[%c0_0, %c0_1] : memref<8x1024xf32, #tpu.memory_space<vmem>>, vector<8x1024xf32>
    %5 = vector.broadcast %0 : f32 to vector<8x1024xf32>
    %6 = arith.mulf %4, %5 : vector<8x1024xf32>
    %7 = vector.broadcast %1 : f32 to vector<8x1024xf32>
    %8 = arith.addf %6, %7 : vector<8x1024xf32>
    %cst = arith.constant 0.000000e+00 : f32
    %9 = vector.broadcast %cst : f32 to vector<8x1024xf32>
    %10 = arith.maximumf %8, %9 : vector<8x1024xf32>
    %11 = vector.broadcast %2 : f32 to vector<8x1024xf32>
    %12 = arith.mulf %10, %11 : vector<8x1024xf32>
    %13 = vector.broadcast %3 : f32 to vector<8x1024xf32>
    %14 = arith.addf %12, %13 : vector<8x1024xf32>
    %c0_2 = arith.constant 0 : index
    %c0_3 = arith.constant 0 : index
    %15 = vector.load %arg3[%c0_2, %c0_3] : memref<8x1024xf32, #tpu.memory_space<vmem>>, vector<8x1024xf32>
    tpu.vector_store %arg3[%c0_2, %c0_3], %14 {strides = array<i32>} : memref<8x1024xf32, #tpu.memory_space<vmem>>, vector<8x1024xf32>,
    return
  }
  func.func @transform_0(%arg0: i32) -> i32 {
    %c0_i32 = arith.constant 0 : i32
    %c0_i32_0 = arith.constant 0 : i32
    return %c0_i32 : i32
  }
  func.func @transform_1(%arg0: i32) -> (i32, i32) {
    %c0_i32 = arith.constant 0 : i32
    %c0_i32_0 = arith.constant 0 : i32
    return %arg0, %c0_i32 : i32, i32
  }
  func.func @transform_2(%arg0: i32) -> (i32, i32) {
    %c0_i32 = arith.constant 0 : i32
    %c0_i32_0 = arith.constant 0 : i32
    return %arg0, %c0_i32 : i32, i32
  }
}

</mosaic_0001>

<llo_original>
// kernel: tpu_custom_call.1
$region0: #{tpu_custom_call.1}
  #allocation0 [shape = 'u32[]', space=smem, size = 0x4, offset = 0x4, fixed_abs, tag = 'smem constant byte address 0x4 - core index']
  #allocation1 [shape = 'u32[72,128]{1,0:T(1,128)}', space=vmem, size = 0x9000, scoped, tag = 'internal scratch']
  %s0 = inlined_call_operand.hbm [shape: f32[4], index: 0, kind: input, shape index: {}]
  %s1 = inlined_call_operand.hbm [shape: f32[8,1024], index: 1, kind: input, shape index: {}]
  %s2 = inlined_call_operand.hbm [shape: f32[8,1024], index: 2, kind: output, shape index: {}]
  %s3 = sld [smem:[#allocation0]]
  $region26: #{tpu_custom_call.1} parent=0
    _
  %s5 = ssub.s32 1, %s3
  %s6 = scalar_select 0, %s5, %s3
  $region1: #{tpu_custom_call.1} parent=0
    #allocation2 [shape = 'u8[512]{0}', space=smem, size = 0x200, scoped, tag = 'input window, operand 0, single buffered']
    #allocation3 [shape = 's32[1]{0}', space=sflag, size = 0x4, scoped, tag = 'scoped memory for tpu_custom_call.1']
    #allocation4 [shape = 's32[1]{0}', space=sflag, size = 0x4, scoped, tag = 'scoped memory for tpu_custom_call.1']
    #allocation5 [shape = 's32[1]{0}', space=sflag, size = 0x4, scoped, tag = 'scoped memory for tpu_custom_call.1']
    #allocation6 [shape = 'u8[32768]{0}', space=vmem, size = 0x8000, scoped, tag = 'input window, operand 1, single buffered']
    #allocation7 [shape = 'u8[32768]{0}', space=vmem, size = 0x8000, scoped, tag = 'output window, operand 0, single buffered']
    %7 = vsyncpa [#allocation5], 0
    %8 = vsyncpa [#allocation3], 0
    %9 = vsyncpa [#allocation4], 0
    // Predicated region
    $region2: #{tpu_custom_call.1} parent=1 // pred_check
      _
    $region3: #{tpu_custom_call.1} parent=1 // pred_check_branch
      %11 = sbr.rel (0) target = $region5
    $region4: #{tpu_custom_call.1} parent=1 // pred_region
      %13 = vsyncadd [#allocation5], 0
      %s15 = sshll.u32 %s0, 4
      %s16 = int_to_ptr.hbm [resolvable:$true] %s15
      %18 = dma.hbm_to_smem %s16, 16, [#allocation2], [#allocation5]
    $region5: #{tpu_custom_call.1} parent=1 // pred_fallthru
      _
    // Predicated region
    $region6: #{tpu_custom_call.1} parent=1 // pred_check
      _
    $region7: #{tpu_custom_call.1} parent=1 // pred_check_branch
      %20 = sbr.rel (0) target = $region9
    $region8: #{tpu_custom_call.1} parent=1 // pred_region
      %22 = vsyncadd [#allocation3], 0
      %s24 = sshll.u32 %s1, 4
      %s25 = int_to_ptr.hbm [resolvable:$true] %s24
      %s26 = sshll.u32 [#allocation6], 4
      %s27 = int_to_ptr.vmem [resolvable:$true] %s26
      %29 = dma.hbm_to_vmem [thread:$0]  %s25, 1024, %s27, [#allocation3]
    $region9: #{tpu_custom_call.1} parent=1 // pred_fallthru
      _
    // Predicated region
    $region10: #{tpu_custom_call.1} parent=1 // pred_check
      _
    $region11: #{tpu_custom_call.1} parent=1 // pred_check_branch
      %31 = sbr.rel (0) target = $region13
    $region12: #{tpu_custom_call.1} parent=1 // pred_region
      %33 = dma.done [#allocation5], 16
    $region13: #{tpu_custom_call.1} parent=1 // pred_fallthru
      _
    // Predicated region
    $region14: #{tpu_custom_call.1} parent=1 // pred_check
      _
    $region15: #{tpu_custom_call.1} parent=1 // pred_check_branch
      %35 = sbr.rel (0) target = $region17
    $region16: #{tpu_custom_call.1} parent=1 // pred_region
      %37 = dma.done [#allocation3], 1024
    $region17: #{tpu_custom_call.1} parent=1 // pred_fallthru
      _
    %38 = sfence
    %s39 = sld [smem:[#allocation2]]
    %s40 = sld [smem:[#allocation2 + $0x1]]
    %s41 = sld [smem:[#allocation2 + $0x2]]
    %s42 = sld [smem:[#allocation2 + $0x3]]
    %v43 = vld [vmem:[#allocation6] sm:$0xff]
    %v44 = vld [vmem:[#allocation6 + $0x8] sm:$0xff]
    %v45 = vld [vmem:[#allocation6 + $0x10] sm:$0xff]
    %v46 = vld [vmem:[#allocation6 + $0x18] sm:$0xff]
    %v47 = vld [vmem:[#allocation6 + $0x20] sm:$0xff]
    %v48 = vld [vmem:[#allocation6 + $0x28] sm:$0xff]
    %v49 = vld [vmem:[#allocation6 + $0x30] sm:$0xff]
    %v50 = vld [vmem:[#allocation6 + $0x38] sm:$0xff]
    %v51 = vstv %s39
    %v52 = vmul.f32 %v43, %v51
    %v53 = vmul.f32 %v44, %v51
    %v54 = vmul.f32 %v45, %v51
    %v55 = vmul.f32 %v46, %v51
    %v56 = vmul.f32 %v47, %v51
    %v57 = vmul.f32 %v48, %v51
    %v58 = vmul.f32 %v49, %v51
    %v59 = vmul.f32 %v50, %v51
    %v60 = vstv %s40
    %v61 = vadd.f32 %v52, %v60
    %v62 = vadd.f32 %v53, %v60
    %v63 = vadd.f32 %v54, %v60
    %v64 = vadd.f32 %v55, %v60
    %v65 = vadd.f32 %v56, %v60
    %v66 = vadd.f32 %v57, %v60
    %v67 = vadd.f32 %v58, %v60
    %v68 = vadd.f32 %v59, %v60
    %v69 = vmax.f32 %v61, 0.0
    %v70 = vmax.f32 %v62, 0.0
    %v71 = vmax.f32 %v63, 0.0
    %v72 = vmax.f32 %v64, 0.0
    %v73 = vmax.f32 %v65, 0.0
    %v74 = vmax.f32 %v66, 0.0
    %v75 = vmax.f32 %v67, 0.0
    %v76 = vmax.f32 %v68, 0.0
    %v77 = vstv %s41
    %v78 = vmul.f32 %v69, %v77
    %v79 = vmul.f32 %v70, %v77
    %v80 = vmul.f32 %v71, %v77
    %v81 = vmul.f32 %v72, %v77
    %v82 = vmul.f32 %v73, %v77
    %v83 = vmul.f32 %v74, %v77
    %v84 = vmul.f32 %v75, %v77
    %v85 = vmul.f32 %v76, %v77
    %v86 = vstv %s42
    %v87 = vadd.f32 %v78, %v86
    %v88 = vadd.f32 %v79, %v86
    %v89 = vadd.f32 %v80, %v86
    %v90 = vadd.f32 %v81, %v86
    %v91 = vadd.f32 %v82, %v86
    %v92 = vadd.f32 %v83, %v86
    %v93 = vadd.f32 %v84, %v86
    %v94 = vadd.f32 %v85, %v86
    %95 = vst [vmem:[#allocation7] sm:$0xff] %v87
    %96 = vst [vmem:[#allocation7 + $0x8] sm:$0xff] %v88
    %97 = vst [vmem:[#allocation7 + $0x10] sm:$0xff] %v89
    %98 = vst [vmem:[#allocation7 + $0x18] sm:$0xff] %v90
    %99 = vst [vmem:[#allocation7 + $0x20] sm:$0xff] %v91
    %100 = vst [vmem:[#allocation7 + $0x28] sm:$0xff] %v92
    %101 = vst [vmem:[#allocation7 + $0x30] sm:$0xff] %v93
    %102 = vst [vmem:[#allocation7 + $0x38] sm:$0xff] %v94
    // Predicated region
    $region18: #{tpu_custom_call.1} parent=1 // pred_check
      _
    $region19: #{tpu_custom_call.1} parent=1 // pred_check_branch
      %104 = sbr.rel (0) target = $region21
    $region20: #{tpu_custom_call.1} parent=1 // pred_region
      %106 = vsyncadd [#allocation4], 0
      %s108 = sshll.u32 [#allocation7], 4
      %s109 = int_to_ptr.vmem [resolvable:$true] %s108
      %s110 = sshll.u32 %s2, 4
      %s111 = int_to_ptr.hbm [resolvable:$true] %s110
      %113 = dma.vmem_to_hbm [thread:$0]  %s109, 1024, %s111, [#allocation4]
    $region21: #{tpu_custom_call.1} parent=1 // pred_fallthru
      _
    // Predicated region
    $region22: #{tpu_custom_call.1} parent=1 // pred_check
      _
    $region23: #{tpu_custom_call.1} parent=1 // pred_check_branch
      %115 = sbr.rel (0) target = $region25
    $region24: #{tpu_custom_call.1} parent=1 // pred_region
      %117 = dma.done [#allocation4], 1024
    $region25: #{tpu_custom_call.1} parent=1 // pred_fallthru
      _
    %118 = vsyncpa [#allocation3], 1
    %119 = vsyncpa [#allocation4], 1
    %120 = vsyncpa [#allocation5], 1

</llo_original>
